<compile_context>
chip_gen: v6e
topology: v6e:2x2x1
jax: 0.10.0
libtpu: 0.0.40
codegen_flags: <defaults>
</compile_context>

<pallas_src>
import jax
import jax.numpy as jnp
from jax.experimental import pallas as pl
from jax.experimental.pallas import tpu as pltpu


def _linear_packed_kernel(x_ref, w_ref, b_ref, o_ref):
    # x_ref: (TB, 128) native dtype -- each 128-lane row holds G = 128//K
    #        consecutive batch samples of K features each.
    # w_ref: (128, G) f32 block-diagonal packed weight.
    # b_ref: SMEM (1,) f32 bias.
    # o_ref: (TB, G) f32 -- column g is the output of sample g within the row.
    x = x_ref[...].astype(jnp.float32)                      # matches x.float()
    o_ref[...] = (
        jnp.dot(x, w_ref[...], preferred_element_type=jnp.float32) + b_ref[0]
    )


def _linear_rowsum_kernel(x_ref, w_ref, b_ref, o_ref):
    # Fallback for generic K: x_ref (TB, K) native dtype, w_ref (1, K),
    # b_ref SMEM (1,), o_ref (TB, 1) f32.  N == 1, so VPU multiply + lane
    # reduce instead of a degenerate 1-column MXU matmul.
    x = x_ref[...].astype(jnp.float32)                      # matches x.float()
    w = w_ref[...].astype(jnp.float32)                      # broadcasts over TB
    o_ref[...] = jnp.sum(x * w, axis=-1, keepdims=True) + b_ref[0]


def _pick_block_rows(rows, row_bytes_in, row_bytes_out,
                     target_step_bytes=8 << 20, vmem_budget_bytes=36 << 20):
    """Rows per grid step.

    Big enough to amortize the ~0.35 us per-grid-step overhead (target ~8 MiB
    of input DMA per step), small enough that the double-buffered input +
    (lane-padded) output tiles stay under `vmem_budget_bytes`, and -- when the
    problem allows it -- at most ceil(rows/2) so there are always >= 2 grid
    steps for megacore sharding on v7x.  Always a multiple of 8 sublanes (or
    the full row count for tiny problems).
    """
    if rows <= 8:
        return rows
    tb = target_step_bytes // max(row_bytes_in, 1)
    tb = min(tb, vmem_budget_bytes // (2 * (row_bytes_in + row_bytes_out)))
    half = -(-rows // 2)                       # ceil(rows / 2)
    half = ((half + 7) // 8) * 8               # round up to 8 sublanes
    tb = min(tb, half)
    tb = max(8, (tb // 8) * 8)
    return int(tb)


def linear_net_forward(x, weight, bias):
    """Pallas equivalent of LinearNet.forward: (x.float() @ W^T + b).

    x:      [B, K]  any dtype (cast to f32 inside the kernel)
    weight: [1, K]  (PyTorch nn.Linear(input_size, 1) convention)
    bias:   [1]
    returns [B, 1] float32
    """
    B, K = x.shape
    N, Kw = weight.shape
    assert N == 1 and Kw == K

    bias_f32 = bias.astype(jnp.float32).reshape(1)
    itemsize = x.dtype.itemsize
    compiler_params = pltpu.CompilerParams(
        dimension_semantics=("parallel",),        # shard batch blocks across TCs
        vmem_limit_bytes=48 * 1024 * 1024,        # > v5e/v6e defaults, < v7x phys
    )

    lane_packable = B > 0 and K < 128 and (128 % K == 0) and ((B * K) % 128 == 0)

    if lane_packable:
        # Lane-dense path: pack G consecutive samples per 128-lane row.
        G = 128 // K
        rows = (B * K) // 128                     # == B // G
        x_dense = x.reshape(rows, 128)            # free contiguous reshape
        # Block-diagonal packed weight: w_packed[g*K + k, g] = w[k].
        w_row = weight.astype(jnp.float32).reshape(K)
        w_packed = (jnp.eye(G, dtype=jnp.float32)[:, None, :]
                    * w_row[None, :, None]).reshape(128, G)

        tb = _pick_block_rows(rows,
                              row_bytes_in=128 * itemsize,
                              row_bytes_out=128 * 4)  # out tile lane-pads to 128
        grid = (pl.cdiv(rows, tb),)

        out = pl.pallas_call(
            _linear_packed_kernel,
            out_shape=jax.ShapeDtypeStruct((rows, G), jnp.float32),
            grid_spec=pltpu.PrefetchScalarGridSpec(
                num_scalar_prefetch=0,
                grid=grid,
                in_specs=[
                    pl.BlockSpec((tb, 128), lambda i: (i, 0)),          # streamed x
                    pl.BlockSpec((128, G), lambda i: (0, 0)),           # resident W
                    pl.BlockSpec(memory_space=pltpu.MemorySpace.SMEM),  # bias
                ],
                out_specs=pl.BlockSpec((tb, G), lambda i: (i, 0)),
            ),
            compiler_params=compiler_params,
        )(x_dense, w_packed, bias_f32)
        return out.reshape(B, 1)

    # Fallback: generic K (does not divide 128, K >= 128, or B not a multiple
    # of 128 // K).  Lane padding wastes VMEM but stays correct.
    K_pad = ((K + 127) // 128) * 128
    tb = _pick_block_rows(B,
                          row_bytes_in=K_pad * itemsize,
                          row_bytes_out=128 * 4)
    grid = (pl.cdiv(B, tb),)

    return pl.pallas_call(
        _linear_rowsum_kernel,
        out_shape=jax.ShapeDtypeStruct((B, 1), jnp.float32),
        grid_spec=pltpu.PrefetchScalarGridSpec(
            num_scalar_prefetch=0,
            grid=grid,
            in_specs=[
                pl.BlockSpec((tb, K), lambda i: (i, 0)),            # streamed x
                pl.BlockSpec((1, K), lambda i: (0, 0)),             # resident W
                pl.BlockSpec(memory_space=pltpu.MemorySpace.SMEM),  # bias
            ],
            out_specs=pl.BlockSpec((tb, 1), lambda i: (i, 0)),
        ),
        compiler_params=compiler_params,
    )(x, weight, bias_f32)


if __name__ == "__main__":
    key = jax.random.PRNGKey(0)
    k_x, k_w, k_b, k_x2, k_x3 = jax.random.split(key, 5)

    input_size = 32
    out_features = 1

    # Deterministic init mimicking nn.Linear: U(-1/sqrt(K), 1/sqrt(K))
    bound = 1.0 / (input_size ** 0.5)
    weight = jax.random.uniform(
        k_w, (out_features, input_size), minval=-bound, maxval=bound,
        dtype=jnp.float32)
    bias = jax.random.uniform(
        k_b, (out_features,), minval=-bound, maxval=bound, dtype=jnp.float32)

    def reference(xv, wv, bv):
        # Accurate f32 reference (elementwise VPU math, no MXU rounding).
        return (jnp.sum(xv.astype(jnp.float32) * wv.astype(jnp.float32)[0],
                        axis=-1, keepdims=True)
                + bv.astype(jnp.float32))

    # Small case: lane-dense packed path, single grid step.
    x_small = jax.random.normal(k_x, (8, input_size), dtype=jnp.float32)
    y_small = jax.block_until_ready(linear_net_forward(x_small, weight, bias))
    assert y_small.shape == (8, out_features) and y_small.dtype == jnp.float32
    # Tolerance covers the MXU's default (possibly bf16-pass) f32 matmul while
    # still catching any structural/mapping bug (those would be O(1) errors).
    assert jnp.allclose(y_small, reference(x_small, weight, bias),
                        atol=2e-2, rtol=2e-2)

    # Larger case: multi-step grid (exercises streaming + >=2 steps / megacore).
    x_big = jax.random.normal(k_x2, (4096, input_size), dtype=jnp.float32)
    y_big = jax.block_until_ready(linear_net_forward(x_big, weight, bias))
    assert y_big.shape == (4096, out_features)
    assert jnp.allclose(y_big, reference(x_big, weight, bias),
                        atol=2e-2, rtol=2e-2)

    # Fallback path: K that does not divide 128 (pure-VPU kernel, tight check).
    k_odd = 5
    w_odd = jax.random.uniform(k_w, (1, k_odd), minval=-1.0, maxval=1.0,
                               dtype=jnp.float32)
    x_odd = jax.random.normal(k_x3, (8, k_odd), dtype=jnp.float32)
    y_odd = jax.block_until_ready(linear_net_forward(x_odd, w_odd, bias))
    assert y_odd.shape == (8, 1)
    assert jnp.allclose(y_odd, reference(x_odd, w_odd, bias),
                        atol=1e-5, rtol=1e-5)

    print("KERNEL_OK")
</pallas_src>

<mosaic_0001>
module attributes {stable_mosaic.version = 11 : i64} {
  func.func @_linear_packed_kernel(%arg0: i32, %arg1: memref<2x128xf32, #tpu.memory_space<vmem>>, %arg2: memref<128x4xf32, #tpu.memory_space<vmem>>, %arg3: memref<1xf32, #tpu.memory_space<smem>>, %arg4: memref<2x4xf32, #tpu.memory_space<vmem>>) attributes {dimension_semantics = [#tpu.dimension_semantics<parallel>], iteration_bounds = array<i64: 1>, scalar_prefetch = 0 : i64, scratch_operands = 0 : i64, tpu.core_type = #tpu.core_type<tc>, window_params = [{transform_indices = @transform_0, window_bounds = array<i64: 2, 128>}, {pipeline_mode = #tpu.pipeline_mode<synchronous>, transform_indices = @transform_1, window_bounds = array<i64: 128, 4>}, {transform_indices = @transform_2, window_bounds = array<i64: 1>}, {transform_indices = @transform_3, window_bounds = array<i64: 2, 4>}]} {
    %c0 = arith.constant 0 : index
    %c0_0 = arith.constant 0 : index
    %0 = vector.load %arg1[%c0, %c0_0] : memref<2x128xf32, #tpu.memory_space<vmem>>, vector<2x128xf32>
    %c0_1 = arith.constant 0 : index
    %c0_2 = arith.constant 0 : index
    %1 = vector.load %arg2[%c0_1, %c0_2] : memref<128x4xf32, #tpu.memory_space<vmem>>, vector<128x4xf32>
    %cst = arith.constant dense<0.000000e+00> : vector<2x4xf32>
    %2 = tpu.matmul %0, %1, %cst {dimension_numbers = #tpu.dot_dimension_numbers<[1], [0], [0], [1], [0, 0, 1, 1], [], []>} : vector<2x128xf32>, vector<128x4xf32>, vector<2x4xf32> -> vector<2x4xf32>
    %c0_3 = arith.constant 0 : index
    %3 = memref.load %arg3[%c0_3] : memref<1xf32, #tpu.memory_space<smem>>
    %4 = vector.broadcast %3 : f32 to vector<2x4xf32>
    %5 = arith.addf %2, %4 : vector<2x4xf32>
    %c0_4 = arith.constant 0 : index
    %c0_5 = arith.constant 0 : index
    %6 = vector.load %arg4[%c0_4, %c0_5] : memref<2x4xf32, #tpu.memory_space<vmem>>, vector<2x4xf32>
    tpu.vector_store %arg4[%c0_4, %c0_5], %5 {strides = array<i32>} : memref<2x4xf32, #tpu.memory_space<vmem>>, vector<2x4xf32>,
    return
  }
  func.func @transform_0(%arg0: i32) -> (i32, i32) {
    %c0_i32 = arith.constant 0 : i32
    %c0_i32_0 = arith.constant 0 : i32
    return %arg0, %c0_i32 : i32, i32
  }
  func.func @transform_1(%arg0: i32) -> (i32, i32) {
    %c0_i32 = arith.constant 0 : i32
    %c0_i32_0 = arith.constant 0 : i32
    %c0_i32_1 = arith.constant 0 : i32
    return %c0_i32, %c0_i32_0 : i32, i32
  }
  func.func @transform_2(%arg0: i32) -> i32 {
    %c0_i32 = arith.constant 0 : i32
    %c0_i32_0 = arith.constant 0 : i32
    return %c0_i32 : i32
  }
  func.func @transform_3(%arg0: i32) -> (i32, i32) {
    %c0_i32 = arith.constant 0 : i32
    %c0_i32_0 = arith.constant 0 : i32
    return %arg0, %c0_i32 : i32, i32
  }
}

</mosaic_0001>

<llo_original>
// kernel: tpu_custom_call.1
$region0: #{tpu_custom_call.1}
  #allocation0 [shape = 'u32[]', space=smem, size = 0x4, offset = 0x4, fixed_abs, tag = 'smem constant byte address 0x4 - core index']
  #allocation1 [shape = 'u32[144,128]{1,0:T(1,128)}', space=vmem, size = 0x12000, scoped, tag = 'internal scratch']
  #allocation2 [shape = 'f32[1]{0:T(128)S(6)}', space=smem, size = 0x200, scoped, tag = 'scoped memory for tpu_custom_call.1']
  %s0 = inlined_call_operand.vmem [shape: f32[2,128], index: 0, kind: input, shape index: {}]
  %s1 = inlined_call_operand.vmem [shape: f32[128,4], index: 1, kind: input, shape index: {}]
  %s2 = inlined_call_operand.<no memory space> [shape: f32[1], index: 2, kind: input, shape index: {}]
  %s3 = inlined_call_operand.hbm [shape: f32[2,4], index: 3, kind: output, shape index: {}]
  %s4 = sld [smem:[#allocation0]]
  $region22: #{tpu_custom_call.1} parent=0
    _
  %s6 = ssub.s32 1, %s4
  %s7 = scalar_select 0, %s6, %s4
  %8 = sst [smem:[#allocation2]] %s2
  $region1: #{tpu_custom_call.1} parent=0
    #allocation3 [shape = 'u8[1024]{0}', space=vmem, size = 0x400, scoped, tag = 'output window, operand 0, single buffered']
    #allocation4 [shape = 's32[1]{0}', space=sflag, size = 0x4, scoped, tag = 'scoped memory for tpu_custom_call.1']
    %9 = vsyncpa [#allocation4], 0
    // Predicated region
    $region2: #{tpu_custom_call.1} parent=1 // pred_check
      _
    $region3: #{tpu_custom_call.1} parent=1 // pred_check_branch
      %11 = sbr.rel (0) target = $region5
    $region4: #{tpu_custom_call.1} parent=1 // pred_region
      _
    $region5: #{tpu_custom_call.1} parent=1 // pred_fallthru
      _
    // Predicated region
    $region6: #{tpu_custom_call.1} parent=1 // pred_check
      _
    $region7: #{tpu_custom_call.1} parent=1 // pred_check_branch
      %13 = sbr.rel (0) target = $region9
    $region8: #{tpu_custom_call.1} parent=1 // pred_region
      _
    $region9: #{tpu_custom_call.1} parent=1 // pred_fallthru
      _
    // Predicated region
    $region10: #{tpu_custom_call.1} parent=1 // pred_check
      _
    $region11: #{tpu_custom_call.1} parent=1 // pred_check_branch
      %15 = sbr.rel (0) target = $region13
    $region12: #{tpu_custom_call.1} parent=1 // pred_region
      _
    $region13: #{tpu_custom_call.1} parent=1 // pred_fallthru
      _
    %v16 = vld [vmem:[%s0] sm:$0x3]
    %v17 = vld [vmem:[%s1] sm:$0xff]
    %v18 = vld [vmem:[%s1 + $0x8] sm:$0xff]
    %v19 = vld [vmem:[%s1 + $0x10] sm:$0xff]
    %v20 = vld [vmem:[%s1 + $0x18] sm:$0xff]
    %v21 = vld [vmem:[%s1 + $0x20] sm:$0xff]
    %v22 = vld [vmem:[%s1 + $0x28] sm:$0xff]
    %v23 = vld [vmem:[%s1 + $0x30] sm:$0xff]
    %v24 = vld [vmem:[%s1 + $0x38] sm:$0xff]
    %v25 = vld [vmem:[%s1 + $0x40] sm:$0xff]
    %v26 = vld [vmem:[%s1 + $0x48] sm:$0xff]
    %v27 = vld [vmem:[%s1 + $0x50] sm:$0xff]
    %v28 = vld [vmem:[%s1 + $0x58] sm:$0xff]
    %v29 = vld [vmem:[%s1 + $0x60] sm:$0xff]
    %v30 = vld [vmem:[%s1 + $0x68] sm:$0xff]
    %v31 = vld [vmem:[%s1 + $0x70] sm:$0xff]
    %v32 = vld [vmem:[%s1 + $0x78] sm:$0xff]
    %s33 = sld [smem:[#allocation2]]
    %v34 = vstv %s33
    %35 = vmatprep.subr.mxu0 0.0
    %36 = vmatpush1.msra.mxu0 %v32
    %37 = vmatprep.subr.mxu0 0.0
    %38 = vmatpush1.msra.mxu0 %v31
    %39 = vmatprep.subr.mxu0 0.0
    %40 = vmatpush1.msra.mxu0 %v30
    %41 = vmatprep.subr.mxu0 0.0
    %42 = vmatpush1.msra.mxu0 %v29
    %43 = vmatprep.subr.mxu0 0.0
    %44 = vmatpush1.msra.mxu0 %v28
    %45 = vmatprep.subr.mxu0 0.0
    %46 = vmatpush1.msra.mxu0 %v27
    %47 = vmatprep.subr.mxu0 0.0
    %48 = vmatpush1.msra.mxu0 %v26
    %49 = vmatprep.subr.mxu0 0.0
    %50 = vmatpush1.msra.mxu0 %v25
    %51 = vmatprep.subr.mxu0 0.0
    %52 = vmatpush1.msra.mxu0 %v24
    %53 = vmatprep.subr.mxu0 0.0
    %54 = vmatpush1.msra.mxu0 %v23
    %55 = vmatprep.subr.mxu0 0.0
    %56 = vmatpush1.msra.mxu0 %v22
    %57 = vmatprep.subr.mxu0 0.0
    %58 = vmatpush1.msra.mxu0 %v21
    %59 = vmatprep.subr.mxu0 0.0
    %60 = vmatpush1.msra.mxu0 %v20
    %61 = vmatprep.subr.mxu0 0.0
    %62 = vmatpush1.msra.mxu0 %v19
    %63 = vmatprep.subr.mxu0 0.0
    %64 = vmatpush1.msra.mxu0 %v18
    %65 = vmatprep.subr.mxu0 0.0
    %66 = vmatpush1.msra.mxu0 %v17
    %67 = vmatprep.subr.mxu0 0.0
    %68 = vmatpush2.msra.mxu0 0.0
    %69 = vmatprep.subr.mxu0 0.0
    %70 = vmatpush2.msra.mxu0 0.0
    %71 = vmatprep.subr.mxu0 0.0
    %72 = vmatpush2.msra.mxu0 0.0
    %73 = vmatprep.subr.mxu0 0.0
    %74 = vmatpush2.msra.mxu0 0.0
    %75 = vmatprep.subr.mxu0 0.0
    %76 = vmatpush2.msra.mxu0 0.0
    %77 = vmatprep.subr.mxu0 0.0
    %78 = vmatpush2.msra.mxu0 0.0
    %79 = vmatprep.subr.mxu0 0.0
    %80 = vmatpush2.msra.mxu0 0.0
    %81 = vmatprep.subr.mxu0 0.0
    %82 = vmatpush2.msra.mxu0 0.0
    %83 = vmatprep.subr.mxu0 0.0
    %84 = vmatpush2.msra.mxu0 0.0
    %85 = vmatprep.subr.mxu0 0.0
    %86 = vmatpush2.msra.mxu0 0.0
    %87 = vmatprep.subr.mxu0 0.0
    %88 = vmatpush2.msra.mxu0 0.0
    %89 = vmatprep.subr.mxu0 0.0
    %90 = vmatpush2.msra.mxu0 0.0
    %91 = vmatprep.subr.mxu0 0.0
    %92 = vmatpush2.msra.mxu0 0.0
    %93 = vmatprep.subr.mxu0 0.0
    %94 = vmatpush2.msra.mxu0 0.0
    %95 = vmatprep.subr.mxu0 0.0
    %96 = vmatpush2.msra.mxu0 0.0
    %97 = vmatprep.subr.mxu0 0.0
    %98 = vmatpush2.msra.mxu0 0.0
    %99 = vmatprep.mubr.f32.mxu0 0.0
    %100 = vmatmul.mubr.f32.gmra.mxu0 %v16
    %v101 = vpop.f32.mrf.mxu0
    %v102 = vadd.f32 %v34, %v101
    %v103 = vpop.f32.mrf.mxu0
    %104 = vdwg.mxu0
    %vm105 = vcmask 25600
    %106 = vst.msk [vmem:[#allocation3] sm:$0x3] %vm105, %v102
    // Predicated region
    $region14: #{tpu_custom_call.1} parent=1 // pred_check
      _
    $region15: #{tpu_custom_call.1} parent=1 // pred_check_branch
      %108 = sbr.rel (0) target = $region17
    $region16: #{tpu_custom_call.1} parent=1 // pred_region
      %s110 = ssub.s32 32, 32
      %111 = vsyncadd [#allocation4], %s110
      %s113 = sshll.u32 [#allocation3], 4
      %s114 = int_to_ptr.vmem [resolvable:$true] %s113
      %116 = dma.vmem_to_hbm [thread:$0]  %s114, 32, %s3, [#allocation4]
    $region17: #{tpu_custom_call.1} parent=1 // pred_fallthru
      _
    // Predicated region
    $region18: #{tpu_custom_call.1} parent=1 // pred_check
      _
    $region19: #{tpu_custom_call.1} parent=1 // pred_check_branch
      %118 = sbr.rel (0) target = $region21
    $region20: #{tpu_custom_call.1} parent=1 // pred_region
      %119 = dma.done [#allocation4], 32
    $region21: #{tpu_custom_call.1} parent=1 // pred_fallthru
      _
    %120 = vsyncpa [#allocation4], 1

</llo_original>
